<compile_context>
chip_gen: v7x
topology: tpu7x:2x2x1
jax: 0.10.0
libtpu: 0.0.40
codegen_flags: <defaults>
</compile_context>

<pallas_src>
import math

import jax
import jax.numpy as jnp
from jax.experimental import pallas as pl
from jax.experimental.pallas import tpu as pltpu

_LANE = 128
# 2 double-buffered input blocks + 2 double-buffered output blocks must fit
# comfortably inside the smallest scoped-VMEM budget (v7x).
_BLOCK_BUDGET_BYTES = 24 * 1024 * 1024
_VMEM_LIMIT_BYTES = 32 * 1024 * 1024


def _sublane_pack(dtype) -> int:
    """Sublane packing granule: 8 rows for 32-bit, 16 for bf16, 32 for 8-bit."""
    itemsize = jnp.dtype(dtype).itemsize
    return 8 * max(1, 4 // max(1, itemsize))


def _fit_tiles(sizes, granules, priorities, budget_elems):
    """Start at full extents; repeatedly halve (rounded up to the dim's
    granule) until the block element count fits the budget.  Lower-priority
    dims are shrunk first; a dim never shrinks below its granule (or its full
    extent if that is smaller), which keeps block shapes layout-legal."""
    tiles = list(sizes)

    def _min_tile(k):
        return sizes[k] if sizes[k] <= granules[k] else granules[k]

    while math.prod(tiles) > budget_elems:
        cand = [k for k in range(len(tiles)) if tiles[k] > _min_tile(k)]
        if not cand:
            break  # smallest legal block; rely on vmem_limit headroom
        k = min(cand, key=lambda t: (priorities[t], -tiles[t]))
        g = granules[k]
        tiles[k] = g * max(1, -(-(tiles[k] // 2) // g))
    return tiles


def _halve_to_granule(size, granule):
    """Tile ~= size/2 rounded up to `granule`, or None if it cannot split."""
    t = granule * max(1, -(-(size // 2) // granule))
    return t if t < size else None


def _swap_kernel_5d(x_ref, o_ref):
    # (td1, tb, td2, tc) -> (td2, tb, td1, tc); lane axis (tc) untouched.
    o_ref[...] = jnp.transpose(x_ref[...], (2, 1, 0, 3))


def _swap_kernel_4d(x_ref, o_ref):
    # (td1, tb, td2) -> (td2, tb, td1).  Decomposed into lane-preserving
    # permutes around a batched minor-dims transpose (well-supported forms).
    t = jnp.transpose(x_ref[...], (1, 0, 2))   # (tb, td1, td2): lanes fixed
    t = jnp.swapaxes(t, -1, -2)                # (tb, td2, td1): 2-D transpose
    o_ref[...] = jnp.transpose(t, (1, 0, 2))   # (td2, tb, td1): lanes fixed


def pallas_transpose(x: jax.Array, dim1: int, dim2: int) -> jax.Array:
    """Pallas equivalent of torch.Tensor.transpose(dim1, dim2)."""
    ndim = x.ndim
    d1 = dim1 % ndim
    d2 = dim2 % ndim

    if d1 == d2:
        # torch returns a view of the same tensor; JAX arrays are immutable,
        # so returning x is semantically identical and free.
        return x

    if d1 > d2:
        d1, d2 = d2, d1

    shape = x.shape
    A = int(math.prod(shape[:d1]))
    D1 = int(shape[d1])
    B = int(math.prod(shape[d1 + 1:d2]))
    D2 = int(shape[d2])
    C = int(math.prod(shape[d2 + 1:]))

    itemsize = jnp.dtype(x.dtype).itemsize
    pack = _sublane_pack(x.dtype)
    budget_elems = max(1, _BLOCK_BUDGET_BYTES // (4 * itemsize))

    out_shape = list(shape)
    out_shape[d1], out_shape[d2] = out_shape[d2], out_shape[d1]
    out_shape = tuple(out_shape)

    if C == 1:
        # dim2 is the trailing (flattened) axis: use the 4-D form
        # (A, D1, B, D2) so D1 is the lane axis of the *output* block
        # (lane-dense stores) and D2 stays the lane axis of the input block.
        x4 = x.reshape(A, D1, B, D2)
        tb, td1, td2 = _fit_tiles(
            sizes=[B, D1, D2],
            granules=[pack, _LANE, _LANE],
            priorities=[0, 1, 1],
            budget_elems=budget_elems)

        grid = (A, pl.cdiv(D1, td1), pl.cdiv(B, tb), pl.cdiv(D2, td2))
        if math.prod(grid) == 1:
            # Expose >= 2 independent grid steps (v7x has two TensorCores).
            if (h := _halve_to_granule(B, pack)) is not None:
                tb = h
            elif (h := _halve_to_granule(D2, _LANE)) is not None:
                td2 = h
            elif (h := _halve_to_granule(D1, _LANE)) is not None:
                td1 = h
            grid = (A, pl.cdiv(D1, td1), pl.cdiv(B, tb), pl.cdiv(D2, td2))

        out4 = pl.pallas_call(
            _swap_kernel_4d,
            out_shape=jax.ShapeDtypeStruct((A, D2, B, D1), x.dtype),
            grid=grid,
            in_specs=[pl.BlockSpec((pl.Squeezed(), td1, tb, td2),
                                   lambda a, i, b, j: (a, i, b, j))],
            out_specs=pl.BlockSpec((pl.Squeezed(), td2, tb, td1),
                                   lambda a, i, b, j: (a, j, b, i)),
            compiler_params=pltpu.CompilerParams(
                dimension_semantics=("parallel",) * len(grid),
                vmem_limit_bytes=_VMEM_LIMIT_BYTES),
        )(x4)
        return out4.reshape(out_shape)

    # General 5-D form (A, D1, B, D2, C).
    x5 = x.reshape(A, D1, B, D2, C)
    tb, td1, td2, tc = _fit_tiles(
        sizes=[B, D1, D2, C],
        granules=[1, pack, pack, _LANE],
        priorities=[0, 1, 1, 2],   # keep the lane (C) tile as wide as possible
        budget_elems=budget_elems)

    grid = (A, pl.cdiv(D1, td1), pl.cdiv(B, tb),
            pl.cdiv(D2, td2), pl.cdiv(C, tc))
    if math.prod(grid) == 1:
        # Expose >= 2 independent grid steps (v7x has two TensorCores).
        if (h := _halve_to_granule(D2, pack)) is not None:
            td2 = h
        elif (h := _halve_to_granule(D1, pack)) is not None:
            td1 = h
        elif (h := _halve_to_granule(B, 1)) is not None:
            tb = h
        grid = (A, pl.cdiv(D1, td1), pl.cdiv(B, tb),
                pl.cdiv(D2, td2), pl.cdiv(C, tc))

    out5 = pl.pallas_call(
        _swap_kernel_5d,
        out_shape=jax.ShapeDtypeStruct((A, D2, B, D1, C), x.dtype),
        grid=grid,
        in_specs=[pl.BlockSpec((pl.Squeezed(), td1, tb, td2, tc),
                               lambda a, i, b, j, c: (a, i, b, j, c))],
        out_specs=pl.BlockSpec((pl.Squeezed(), td2, tb, td1, tc),
                               lambda a, i, b, j, c: (a, j, b, i, c)),
        compiler_params=pltpu.CompilerParams(
            dimension_semantics=("parallel",) * len(grid),
            vmem_limit_bytes=_VMEM_LIMIT_BYTES),
    )(x5)
    return out5.reshape(out_shape)


class Transpose:
    """JAX/Pallas mirror of the PyTorch nn.Module (no parameters)."""

    def __init__(self, dim1: int, dim2: int) -> None:
        self.dim1 = dim1
        self.dim2 = dim2

    def __call__(self, x: jax.Array) -> jax.Array:
        return pallas_transpose(x, self.dim1, self.dim2)


if __name__ == "__main__":
    key = jax.random.PRNGKey(0)

    # layout: NCHW, shape (N=2, C=4, H=16, W=16); Transpose(1, 2): NCHW -> NHCW.
    x = jax.random.normal(key, (2, 4, 16, 16), dtype=jnp.float32)
    out = jax.block_until_ready(Transpose(1, 2)(x))
    ref = jnp.swapaxes(x, 1, 2)
    assert out.shape == ref.shape and out.dtype == ref.dtype
    assert bool(jnp.array_equal(out, ref))

    # Trailing-axis swap (C == 1 path: D1 becomes the output lane axis).
    x2 = jax.random.normal(jax.random.PRNGKey(0), (2, 4, 8, 128),
                           dtype=jnp.float32)
    out2 = jax.block_until_ready(Transpose(-2, -1)(x2))
    assert bool(jnp.array_equal(out2, jnp.swapaxes(x2, -2, -1)))

    # A == 1 case: exercises the >=2-grid-step split and a tiled D2 axis.
    x3 = jax.random.normal(jax.random.PRNGKey(0), (4, 16, 16),
                           dtype=jnp.float32)
    out3 = jax.block_until_ready(Transpose(0, 1)(x3))
    assert bool(jnp.array_equal(out3, jnp.swapaxes(x3, 0, 1)))

    print("KERNEL_OK")
</pallas_src>

<mosaic_0001>
module attributes {stable_mosaic.version = 11 : i64} {
  func.func @_swap_kernel_5d(%arg0: i32, %arg1: i32, %arg2: i32, %arg3: i32, %arg4: i32, %arg5: memref<1x4x1x16x16xf32, #tpu.memory_space<vmem>>, %arg6: memref<1x16x1x4x16xf32, #tpu.memory_space<vmem>>) attributes {dimension_semantics = [#tpu.dimension_semantics<parallel>, #tpu.dimension_semantics<parallel>, #tpu.dimension_semantics<parallel>, #tpu.dimension_semantics<parallel>, #tpu.dimension_semantics<parallel>], iteration_bounds = array<i64: 2, 1, 1, 1, 1>, scalar_prefetch = 0 : i64, scratch_operands = 0 : i64, tpu.core_type = #tpu.core_type<tc>, window_params = [{transform_indices = @transform_0, window_bounds = array<i64: 1, 4, 1, 16, 16>}, {transform_indices = @transform_1, window_bounds = array<i64: 1, 16, 1, 4, 16>}]} {
    %c0 = arith.constant 0 : index
    %c0_0 = arith.constant 0 : index
    %c0_1 = arith.constant 0 : index
    %c0_2 = arith.constant 0 : index
    %c0_3 = arith.constant 0 : index
    %0 = vector.load %arg5[%c0, %c0_0, %c0_1, %c0_2, %c0_3] : memref<1x4x1x16x16xf32, #tpu.memory_space<vmem>>, vector<1x4x1x16x16xf32>
    %1 = vector.shape_cast %0 : vector<1x4x1x16x16xf32> to vector<4x1x16x16xf32>
    %2 = tpu.transpose %1, [2, 1, 0, 3] : vector<4x1x16x16xf32> -> vector<16x1x4x16xf32>
    %c0_4 = arith.constant 0 : index
    %c0_5 = arith.constant 0 : index
    %c0_6 = arith.constant 0 : index
    %c0_7 = arith.constant 0 : index
    %c0_8 = arith.constant 0 : index
    %3 = vector.load %arg6[%c0_4, %c0_5, %c0_6, %c0_7, %c0_8] : memref<1x16x1x4x16xf32, #tpu.memory_space<vmem>>, vector<1x16x1x4x16xf32>
    %4 = vector.shape_cast %3 : vector<1x16x1x4x16xf32> to vector<16x1x4x16xf32>
    %5 = vector.shape_cast %2 : vector<16x1x4x16xf32> to vector<1x16x1x4x16xf32>
    tpu.vector_store %arg6[%c0_4, %c0_5, %c0_6, %c0_7, %c0_8], %5 {strides = array<i32>} : memref<1x16x1x4x16xf32, #tpu.memory_space<vmem>>, vector<1x16x1x4x16xf32>,
    return
  }
  func.func @transform_0(%arg0: i32, %arg1: i32, %arg2: i32, %arg3: i32, %arg4: i32) -> (i32, i32, i32, i32, i32) {
    %c0_i32 = arith.constant 0 : i32
    return %arg0, %arg1, %arg2, %arg3, %arg4 : i32, i32, i32, i32, i32
  }
  func.func @transform_1(%arg0: i32, %arg1: i32, %arg2: i32, %arg3: i32, %arg4: i32) -> (i32, i32, i32, i32, i32) {
    %c0_i32 = arith.constant 0 : i32
    return %arg0, %arg3, %arg2, %arg1, %arg4 : i32, i32, i32, i32, i32
  }
}

</mosaic_0001>

<llo_original>
// kernel: tpu_custom_call.1
$region0: #{tpu_custom_call.1}
  #allocation0 [shape = 'u32[]', space=smem, size = 0x4, offset = 0x4, fixed_abs, tag = 'smem constant byte address 0x4 - core index']
  #allocation1 [shape = 'u32[144,128]{1,0:T(1,128)}', space=vmem, size = 0x12000, scoped, tag = 'internal scratch']
  %s0 = inlined_call_operand.hbm [shape: f32[2,4,1,16,16], index: 0, kind: input, shape index: {}]
  %s1 = inlined_call_operand.hbm [shape: f32[2,16,1,4,16], index: 1, kind: output, shape index: {}]
  %s2 = sld [smem:[#allocation0]]
  $region41: #{tpu_custom_call.1} parent=0
    _
  %s4 = ssub.s32 1, %s2
  %s5 = scalar_select 0, %s4, %s2
  $region1: #{tpu_custom_call.1} parent=0
    #allocation2 [shape = 'u8[65536]{0}', space=vmem, size = 0x10000, scoped, tag = 'input window, operand 0']
    #allocation3 [shape = 's32[2]{0}', space=sflag, size = 0x8, scoped, tag = 'scoped memory for tpu_custom_call.1']
    #allocation4 [shape = 's32[2]{0}', space=sflag, size = 0x8, scoped, tag = 'scoped memory for tpu_custom_call.1']
    #allocation5 [shape = 'u8[65536]{0}', space=vmem, size = 0x10000, scoped, tag = 'output window, operand 0']
    %6 = vsyncpa [#allocation3], 0
    %s7 = scalar_lea.sflag [#allocation3], 1
    %8 = vsyncpa %s7, 0
    %9 = vsyncpa [#allocation4], 0
    %s10 = scalar_lea.sflag [#allocation4], 1
    %11 = vsyncpa %s10, 0
    loop: start=0, step=1, limit=4
    $region2: #{tpu_custom_call.1} parent=1 // loop_pre_header
      _
    $region3: #{tpu_custom_call.1} parent=1 // loop_header
      %s13 = sphi 0, %s17
      %p14 = scmp.ge.s32.totalorder %s13, 4
      %s20 = sphi 0, %s53
      %s21 = sphi 0, %s49
      %s22 = sphi 0, %s45
      %s23 = sphi 0, %s41
      %s24 = sphi 0, %s37
      %s25 = sphi 0, %s20
      %s26 = sphi 0, %s21
      %s27 = sphi 0, %s22
      %s28 = sphi 0, %s23
      %s29 = sphi 0, %s24
      %s30 = sphi 0, %s25
      %s31 = sphi 0, %s26
      %s32 = sphi 0, %s27
      %s33 = sphi 0, %s28
      %s34 = sphi 0, %s29
      %s64 = sphi 0, %s66
      %s67 = sphi 0, %s64
      %s68 = sphi 0, %s67
      %s84 = sphi 0, %s68
      %s98 = sphi 0, %s100
      %s101 = sphi 0, %s98
      %s102 = sphi 0, %s101
      %s118 = sphi 0, %s102
    $region4: #{tpu_custom_call.1} parent=1 // loop_header_branch
      %16 = sbr.rel (%p14) target = $region8
    $region5: #{tpu_custom_call.1} parent=1 // loop_body
      %s18 = ssub.s32 %s13, 1
      %s19 = ssub.s32 %s13, 2
      %s35 = sadd.s32 1, %s24
      %p36 = scmp.ge.s32.totalorder %s35, 1
      %s37 = scalar_select %p36, 0, %s35
      %s38 = sadd.s32 1, %s23
      %s39 = scalar_select %p36, %s38, %s23
      %p40 = scmp.ge.s32.totalorder %s39, 1
      %s41 = scalar_select %p40, 0, %s39
      %s42 = sadd.s32 1, %s22
      %s43 = scalar_select %p40, %s42, %s22
      %p44 = scmp.ge.s32.totalorder %s43, 1
      %s45 = scalar_select %p44, 0, %s43
      %s46 = sadd.s32 1, %s21
      %s47 = scalar_select %p44, %s46, %s21
      %p48 = scmp.ge.s32.totalorder %s47, 1
      %s49 = scalar_select %p48, 0, %s47
      %s50 = sadd.s32 1, %s20
      %s51 = scalar_select %p48, %s50, %s20
      %p52 = scmp.ge.s32.totalorder %s51, 2
      %s53 = scalar_select %p52, 0, %s51
      %s54 = ssub.s32 %s20, %s53
      %s55 = ssub.s32 %s21, %s49
      %s56 = sor.u32 %s54, %s55
      %s57 = ssub.s32 %s22, %s45
      %s58 = sor.u32 %s56, %s57
      %s59 = ssub.s32 %s23, %s41
      %s60 = sor.u32 %s58, %s59
      %s61 = ssub.s32 %s24, %s37
      %s62 = sor.u32 %s60, %s61
      %p63 = scmp.eq.s32.totalorder %s62, 0
      %s65 = sadd.s32 %s64, 1
      %s66 = scalar_select %p63, %s64, %s65
      %p69 = pneg %p63
      %p70 = scmp.eq.s32.totalorder %s13, 1
      %p71 = por %p69, %p70
      %p72 = scmp.ne.s32.totalorder %s64, %s67
      %p73 = scmp.eq.s32.totalorder %s13, 0
      %p74 = por %p72, %p73
      %p75 = scmp.ne.s32.totalorder %s64, %s67
      %p76 = scmp.eq.s32.totalorder %s18, 1
      %p77 = por %p75, %p76
      %p78 = scmp.ne.s32.totalorder %s67, %s68
      %p79 = scmp.eq.s32.totalorder %s18, 0
      %p80 = por %p78, %p79
      %p81 = scmp.ne.s32.totalorder %s67, %s68
      %p82 = scmp.eq.s32.totalorder %s19, 1
      %p83 = por %p81, %p82
      %p85 = scmp.ne.s32.totalorder %s68, %s84
      %p86 = scmp.eq.s32.totalorder %s19, 0
      %p87 = por %p85, %p86
      %s88 = ssub.s32 %s20, %s53
      %s89 = ssub.s32 %s23, %s41
      %s90 = sor.u32 %s88, %s89
      %s91 = ssub.s32 %s22, %s45
      %s92 = sor.u32 %s90, %s91
      %s93 = ssub.s32 %s21, %s49
      %s94 = sor.u32 %s92, %s93
      %s95 = ssub.s32 %s24, %s37
      %s96 = sor.u32 %s94, %s95
      %p97 = scmp.eq.s32.totalorder %s96, 0
      %s99 = sadd.s32 %s98, 1
      %s100 = scalar_select %p97, %s98, %s99
      %p103 = pneg %p97
      %p104 = scmp.eq.s32.totalorder %s13, 1
      %p105 = por %p103, %p104
      %p106 = scmp.ne.s32.totalorder %s98, %s101
      %p107 = scmp.eq.s32.totalorder %s13, 0
      %p108 = por %p106, %p107
      %p109 = scmp.ne.s32.totalorder %s98, %s101
      %p110 = scmp.eq.s32.totalorder %s18, 1
      %p111 = por %p109, %p110
      %p112 = scmp.ne.s32.totalorder %s101, %s102
      %p113 = scmp.eq.s32.totalorder %s18, 0
      %p114 = por %p112, %p113
      %p115 = scmp.ne.s32.totalorder %s101, %s102
      %p116 = scmp.eq.s32.totalorder %s19, 1
      %p117 = por %p115, %p116
      %p119 = scmp.ne.s32.totalorder %s102, %s118
      %p120 = scmp.eq.s32.totalorder %s19, 0
      %p121 = por %p119, %p120
      %p122 = scmp.le.s32.totalorder 1, %s13
      %p123 = scmp.lt.s32.totalorder %s13, 3
      %p124 = pnand %p122, %p123
      %p125 = pneg %p124
      // Predicated region
      $region9: #{tpu_custom_call.1} parent=5 // pred_check
        _
      $region10: #{tpu_custom_call.1} parent=5 // pred_check_branch
        %127 = sbr.rel (%p124) target = $region12
      $region11: #{tpu_custom_call.1} parent=5 // pred_region
        %s128 = ssub.s32 %s13, 1
      $region12: #{tpu_custom_call.1} parent=5 // pred_fallthru
        _
      %p129 = scmp.lt.s32.totalorder %s13, 2
      // Predicated region
      $region13: #{tpu_custom_call.1} parent=5 // pred_check
        %p130 = pneg %p129
      $region14: #{tpu_custom_call.1} parent=5 // pred_check_branch
        %132 = sbr.rel (%p130) target = $region16
      $region15: #{tpu_custom_call.1} parent=5 // pred_region
        // Predicated region
        $region17: #{tpu_custom_call.1} parent=15 // pred_check
          %p133 = pneg %p74
        $region18: #{tpu_custom_call.1} parent=15 // pred_check_branch
          %135 = sbr.rel (%p133) target = $region20
        $region19: #{tpu_custom_call.1} parent=15 // pred_region
          %s136 = sand.u32 %s64, 1
          %s137 = scalar_lea.sflag [#allocation3], %s136
          %s138 = sand.u32 %s64, 1
          %s139 = smul.addr %s138, 64
          %s140 = scalar_lea.vmem [#allocation2], %s139
          %s141 = smul.u32 4, %s21
          %s142 = smul.u32 2, %s23
          %s144 = ssub.s32 1024, 1024
          %145 = vsyncadd %s137, %s144
          %s146 = sadd.s32 %s24, %s142
          %s147 = smul.addr %s22, 2
          %s148 = sadd.s32 %s146, %s147
          %s149 = smul.addr %s141, 2
          %s150 = sadd.s32 %s148, %s149
          %s151 = smul.addr %s20, 8
          %s152 = sadd.s32 %s150, %s151
          %s153 = smul.addr %s152, 128
          %s154 = scalar_lea.hbm %s0, %s153
          %s155 = sshll.u32 %s140, 4
          %s156 = int_to_ptr.vmem [resolvable:$true] %s155
          %161 = dma.hbm_to_vmem [thread:$0]  %s154, 1024, %s156, %s137, 128, 128, 8
        $region20: #{tpu_custom_call.1} parent=15 // pred_fallthru
          _
      $region16: #{tpu_custom_call.1} parent=5 // pred_fallthru
        _
      %p162 = scmp.le.s32.totalorder 1, %s13
      %p163 = scmp.lt.s32.totalorder %s13, 3
      %p164 = pnand %p162, %p163
      %p165 = pneg %p164
      // Predicated region
      $region21: #{tpu_custom_call.1} parent=5 // pred_check
        _
      $region22: #{tpu_custom_call.1} parent=5 // pred_check_branch
        %167 = sbr.rel (%p164) target = $region24
      $region23: #{tpu_custom_call.1} parent=5 // pred_region
        %s168 = ssub.s32 %s13, 1
        %s169 = sand.u32 %s67, 1
        %s170 = scalar_lea.sflag [#allocation3], %s169
        %s171 = sand.u32 %s67, 1
        %s172 = smul.addr %s171, 64
        %s173 = scalar_lea.vmem [#allocation2], %s172
        // Predicated region
        $region25: #{tpu_custom_call.1} parent=23 // pred_check
          %p174 = pneg %p80
        $region26: #{tpu_custom_call.1} parent=23 // pred_check_branch
          %176 = sbr.rel (%p174) target = $region28
        $region27: #{tpu_custom_call.1} parent=23 // pred_region
          %177 = dma.done %s170, 1024
        $region28: #{tpu_custom_call.1} parent=23 // pred_fallthru
          _
        %s178 = sand.u32 %s67, 1
        %s179 = scalar_lea.sflag [#allocation3], %s178
        %s180 = sand.u32 %s67, 1
        %s181 = smul.addr %s180, 64
        %s182 = scalar_lea.vmem [#allocation2], %s181
        %p183 = pneg %p80
        %p184 = pneg %p77
        %p185 = pneg %p114
        %p186 = pneg %p111
        %s187 = sand.u32 %s101, 1
        %s188 = scalar_lea.sflag [#allocation4], %s187
        %s189 = sand.u32 %s101, 1
        %s190 = smul.addr %s189, 64
        %s191 = scalar_lea.vmem [#allocation5], %s190
        %s192 = smul.u32 4, %s26
        %s193 = smul.u32 2, %s28
        %s194 = smul.u32 16, %s28
        %v195 = vld [vmem:[%s173] sm:$0xff]
        %v196 = vld [vmem:[%s173 + $0x8] sm:$0xff]
        %v197 = vld [vmem:[%s173 + $0x10] sm:$0xff]
        %v198 = vld [vmem:[%s173 + $0x18] sm:$0xff]
        %v199 = vld [vmem:[%s173 + $0x20] sm:$0xff]
        %v200 = vld [vmem:[%s173 + $0x28] sm:$0xff]
        %v201 = vld [vmem:[%s173 + $0x30] sm:$0xff]
        %v202 = vld [vmem:[%s173 + $0x38] sm:$0xff]
        %v203 = vcombine.low %v195, %v199
        %v204 = vcombine.high %v195, %v199
        %v206 = vunpack.c.l.s4 1983009808
        %v207 = vunpack.c.0.s8 %v206
        %v208 = vlaneseq
        %v209 = vshrl.u32 %v208, 7
        %v210 = vsub.s32 %v207, %v209
        %v211 = vrot.slane %v203, %v210
        %v213 = vunpack.c.l.s4 1983009808
        %v214 = vunpack.c.0.s8 %v213
        %v215 = vlaneseq
        %v216 = vshrl.u32 %v215, 7
        %v217 = vsub.s32 %v214, %v216
        %v218 = vrot.slane %v204, %v217
        %v219 = vcombine.low %v197, %v201
        %v220 = vcombine.high %v197, %v201
        %v222 = vunpack.c.l.s4 1983009808
        %v223 = vunpack.c.0.s8 %v222
        %v224 = vlaneseq
        %v225 = vshrl.u32 %v224, 7
        %v226 = vsub.s32 %v223, %v225
        %v227 = vrot.slane %v219, %v226
        %v229 = vunpack.c.l.s4 1983009808
        %v230 = vunpack.c.0.s8 %v229
        %v231 = vlaneseq
        %v232 = vshrl.u32 %v231, 7
        %v233 = vsub.s32 %v230, %v232
        %v234 = vrot.slane %v220, %v233
        %v235 = vcombine.low %v211, %v227
        %v236 = vcombine.high %v211, %v227
        %v238 = vunpack.c.l.s4 1934713408
        %v239 = vunpack.c.0.s8 %v238
        %v240 = vlaneseq
        %v241 = vshrl.u32 %v240, 7
        %v242 = vsub.s32 %v239, %v241
        %v243 = vrot.slane %v235, %v242
        %v245 = vunpack.c.l.s4 1934713408
        %v246 = vunpack.c.0.s8 %v245
        %v247 = vlaneseq
        %v248 = vshrl.u32 %v247, 7
        %v249 = vsub.s32 %v246, %v248
        %v250 = vrot.slane %v236, %v249
        %v251 = vcombine.low %v218, %v234
        %v252 = vcombine.high %v218, %v234
        %v254 = vunpack.c.l.s4 1934713408
        %v255 = vunpack.c.0.s8 %v254
        %v256 = vlaneseq
        %v257 = vshrl.u32 %v256, 7
        %v258 = vsub.s32 %v255, %v257
        %v259 = vrot.slane %v251, %v258
        %v261 = vunpack.c.l.s4 1934713408
        %v262 = vunpack.c.0.s8 %v261
        %v263 = vlaneseq
        %v264 = vshrl.u32 %v263, 7
        %v265 = vsub.s32 %v262, %v264
        %v266 = vrot.slane %v252, %v265
        %v267 = vcombine.high %v243, 0.0
        %v268 = vcombine.high %v250, 0.0
        %v269 = vcombine.high %v259, 0.0
        %v270 = vcombine.high %v266, 0.0
        %v271 = vcombine.low %v196, %v200
        %v272 = vcombine.high %v196, %v200
        %v274 = vunpack.c.l.s4 1983009808
        %v275 = vunpack.c.0.s8 %v274
        %v276 = vlaneseq
        %v277 = vshrl.u32 %v276, 7
        %v278 = vsub.s32 %v275, %v277
        %v279 = vrot.slane %v271, %v278
        %v281 = vunpack.c.l.s4 1983009808
        %v282 = vunpack.c.0.s8 %v281
        %v283 = vlaneseq
        %v284 = vshrl.u32 %v283, 7
        %v285 = vsub.s32 %v282, %v284
        %v286 = vrot.slane %v272, %v285
        %v287 = vcombine.low %v198, %v202
        %v288 = vcombine.high %v198, %v202
        %v290 = vunpack.c.l.s4 1983009808
        %v291 = vunpack.c.0.s8 %v290
        %v292 = vlaneseq
        %v293 = vshrl.u32 %v292, 7
        %v294 = vsub.s32 %v291, %v293
        %v295 = vrot.slane %v287, %v294
        %v297 = vunpack.c.l.s4 1983009808
        %v298 = vunpack.c.0.s8 %v297
        %v299 = vlaneseq
        %v300 = vshrl.u32 %v299, 7
        %v301 = vsub.s32 %v298, %v300
        %v302 = vrot.slane %v288, %v301
        %v303 = vcombine.low %v279, %v295
        %v304 = vcombine.high %v279, %v295
        %v306 = vunpack.c.l.s4 1934713408
        %v307 = vunpack.c.0.s8 %v306
        %v308 = vlaneseq
        %v309 = vshrl.u32 %v308, 7
        %v310 = vsub.s32 %v307, %v309
        %v311 = vrot.slane %v303, %v310
        %v313 = vunpack.c.l.s4 1934713408
        %v314 = vunpack.c.0.s8 %v313
        %v315 = vlaneseq
        %v316 = vshrl.u32 %v315, 7
        %v317 = vsub.s32 %v314, %v316
        %v318 = vrot.slane %v304, %v317
        %v319 = vcombine.low %v286, %v302
        %v320 = vcombine.high %v286, %v302
        %v322 = vunpack.c.l.s4 1934713408
        %v323 = vunpack.c.0.s8 %v322
        %v324 = vlaneseq
        %v325 = vshrl.u32 %v324, 7
        %v326 = vsub.s32 %v323, %v325
        %v327 = vrot.slane %v319, %v326
        %v329 = vunpack.c.l.s4 1934713408
        %v330 = vunpack.c.0.s8 %v329
        %v331 = vlaneseq
        %v332 = vshrl.u32 %v331, 7
        %v333 = vsub.s32 %v330, %v332
        %v334 = vrot.slane %v320, %v333
        %v335 = vcombine.high %v311, 0.0
        %v336 = vcombine.high %v318, 0.0
        %v337 = vcombine.high %v327, 0.0
        %v338 = vcombine.high %v334, 0.0
        %vm339 = vcmask 125952
        %340 = vst.msk [vmem:[%s191] sm:$0xf] %vm339, %v243
        %341 = vst.msk [vmem:[%s191 + $0x4] sm:$0xf] %vm339, %v267
        %342 = vst.msk [vmem:[%s191 + $0x8] sm:$0xf] %vm339, %v250
        %343 = vst.msk [vmem:[%s191 + $0xc] sm:$0xf] %vm339, %v268
        %344 = vst.msk [vmem:[%s191 + $0x10] sm:$0xf] %vm339, %v259
        %345 = vst.msk [vmem:[%s191 + $0x14] sm:$0xf] %vm339, %v269
        %346 = vst.msk [vmem:[%s191 + $0x18] sm:$0xf] %vm339, %v266
        %347 = vst.msk [vmem:[%s191 + $0x1c] sm:$0xf] %vm339, %v270
        %348 = vst.msk [vmem:[%s191 + $0x20] sm:$0xf] %vm339, %v311
        %349 = vst.msk [vmem:[%s191 + $0x24] sm:$0xf] %vm339, %v335
        %350 = vst.msk [vmem:[%s191 + $0x28] sm:$0xf] %vm339, %v318
        %351 = vst.msk [vmem:[%s191 + $0x2c] sm:$0xf] %vm339, %v336
        %352 = vst.msk [vmem:[%s191 + $0x30] sm:$0xf] %vm339, %v327
        %353 = vst.msk [vmem:[%s191 + $0x34] sm:$0xf] %vm339, %v337
        %354 = vst.msk [vmem:[%s191 + $0x38] sm:$0xf] %vm339, %v334
        %355 = vst.msk [vmem:[%s191 + $0x3c] sm:$0xf] %vm339, %v338
        %s356 = sand.u32 %s101, 1
        %s357 = scalar_lea.sflag [#allocation4], %s356
        %s358 = sand.u32 %s101, 1
        %s359 = smul.addr %s358, 64
        %s360 = scalar_lea.vmem [#allocation5], %s359
        // Predicated region
        $region29: #{tpu_custom_call.1} parent=23 // pred_check
          %p361 = pneg %p111
        $region30: #{tpu_custom_call.1} parent=23 // pred_check_branch
          %363 = sbr.rel (%p361) target = $region32
        $region31: #{tpu_custom_call.1} parent=23 // pred_region
          %s364 = smul.u32 16, %s28
          %s366 = ssub.s32 1024, 1024
          %367 = vsyncadd %s357, %s366
          %s368 = sadd.s32 %s29, %s26
          %s369 = sadd.s32 %s368, %s27
          %s370 = sadd.s32 %s369, %s364
          %s371 = smul.addr %s25, 16
          %s372 = sadd.s32 %s370, %s371
          %s373 = smul.addr %s372, 64
          %s374 = scalar_lea.hbm %s1, %s373
          %s375 = sshll.u32 %s360, 4
          %s376 = int_to_ptr.vmem [resolvable:$true] %s375
          %381 = dma.vmem_to_hbm [thread:$0]  %s376, 1024, %s374, %s357, 64, 64, 4
        $region32: #{tpu_custom_call.1} parent=23 // pred_fallthru
          _
      $region24: #{tpu_custom_call.1} parent=5 // pred_fallthru
        _
      %p382 = scmp.le.s32.totalorder 2, %s13
      // Predicated region
      $region33: #{tpu_custom_call.1} parent=5 // pred_check
        %p383 = pneg %p382
      $region34: #{tpu_custom_call.1} parent=5 // pred_check_branch
        %385 = sbr.rel (%p383) target = $region36
      $region35: #{tpu_custom_call.1} parent=5 // pred_region
        %s386 = ssub.s32 %s13, 2
        // Predicated region
        $region37: #{tpu_custom_call.1} parent=35 // pred_check
          %p387 = pneg %p117
        $region38: #{tpu_custom_call.1} parent=35 // pred_check_branch
          %389 = sbr.rel (%p387) target = $region40
        $region39: #{tpu_custom_call.1} parent=35 // pred_region
          %s390 = sand.u32 %s102, 1
          %s391 = scalar_lea.sflag [#allocation4], %s390
          %s392 = sand.u32 %s102, 1
          %s393 = smul.addr %s392, 64
          %s394 = scalar_lea.vmem [#allocation5], %s393
          %395 = dma.done %s391, 1024
        $region40: #{tpu_custom_call.1} parent=35 // pred_fallthru
          _
      $region36: #{tpu_custom_call.1} parent=5 // pred_fallthru
        _
    $region6: #{tpu_custom_call.1} parent=1 // loop_footer
      %s17 = sadd.s32 1, %s13
    $region7: #{tpu_custom_call.1} parent=1 // loop_footer_branch
      %12 = sbr.rel target = $region3
    $region8: #{tpu_custom_call.1} parent=1 // loop_exit
      _
    %396 = vsyncpa [#allocation3], 1
    %s397 = scalar_lea.sflag [#allocation3], 1
    %398 = vsyncpa %s397, 1
    %399 = vsyncpa [#allocation4], 1
    %s400 = scalar_lea.sflag [#allocation4], 1
    %401 = vsyncpa %s400, 1

</llo_original>
